<compile_context>
chip_gen: v6e
topology: v6e:2x2x1
jax: 0.10.0
libtpu: 0.0.40
codegen_flags: <defaults>
</compile_context>

<pallas_src>
import math

import jax
import jax.numpy as jnp
from jax import lax
from jax.experimental import pallas as pl
from jax.experimental.pallas import tpu as pltpu

EPS = 1e-5  # torch.nn.LayerNorm default eps


def _ln_stats(v):
    """(v - mean) * rsqrt(var + eps). Gamma/beta are folded into the weights."""
    mu = jnp.mean(v, axis=-1, keepdims=True)
    var = jnp.mean((v - mu) ** 2, axis=-1, keepdims=True)
    return (v - mu) * lax.rsqrt(var + EPS)


# --------------------- stage 1: LN1 stats + fused QKV ------------------------


def _qkv_kernel(x_ref, wqkv_ref, bqkv_ref, q_ref, k_ref, v_ref):
    D = x_ref.shape[-1]
    xn = _ln_stats(x_ref[...].astype(jnp.float32))
    qkv = jnp.dot(xn.astype(jnp.bfloat16), wqkv_ref[...],
                  preferred_element_type=jnp.float32) + bqkv_ref[...]
    q_ref[...] = qkv[:, :D].astype(jnp.bfloat16)          # 1/sqrt(hd) pre-folded
    k_ref[...] = qkv[:, D:2 * D].astype(jnp.bfloat16)
    v_ref[...] = qkv[:, 2 * D:].astype(jnp.bfloat16)


# ------------- stage 2: attention + out-proj + LN2 + MLP + residuals ---------


def make_attn_mlp_kernel(heads):
    def kernel(x_ref, q_ref, kT_ref, v_ref, wo_ref, bo_ref,
               w1_ref, b1_ref, w2_ref, b2_ref, out_ref, attn_s):
        D = x_ref.shape[-1]
        hd = D // heads

        x = x_ref[...].astype(jnp.float32)                 # (TQ, D) residual rows
        q = q_ref[...]                                     # (TQ, D) bf16, pre-scaled

        for hi in range(heads):                            # static unroll
            s0 = hi * hd
            scores = jnp.dot(q[:, s0:s0 + hd], kT_ref[s0:s0 + hd, :],
                             preferred_element_type=jnp.float32)       # (TQ, S)
            scores = scores - jnp.max(scores, axis=-1, keepdims=True)
            p = jnp.exp(scores)
            l = jnp.sum(p, axis=-1, keepdims=True)                     # f32 row sum
            ho = jnp.dot(p.astype(jnp.bfloat16), v_ref[:, s0:s0 + hd],
                         preferred_element_type=jnp.float32)           # (TQ, hd)
            # deferred softmax normalization on the small (TQ, hd) result
            ho = ho * pl.reciprocal(l, approx=True)
            attn_s[:, s0:s0 + hd] = ho.astype(jnp.bfloat16)

        # single K=D output projection over all heads (full MXU depth)
        attn = jnp.dot(attn_s[...], wo_ref[...],
                       preferred_element_type=jnp.float32)
        x2 = x + attn + bo_ref[...]                        # residual #1

        h2 = _ln_stats(x2)                                 # LN2 gamma/beta folded in w1/b1
        m = jnp.dot(h2.astype(jnp.bfloat16), w1_ref[...],
                    preferred_element_type=jnp.float32) + b1_ref[...]
        # TODO(synk): PyTorch nn.GELU default is exact erf-GELU; tanh approx here.
        m = jax.nn.gelu(m, approximate=True)
        m = jnp.dot(m.astype(jnp.bfloat16), w2_ref[...],
                    preferred_element_type=jnp.float32) + b2_ref[...]
        out_ref[...] = (x2 + m).astype(out_ref.dtype)      # residual #2

    return kernel


# --------------------------------- wrapper -----------------------------------


def _device_kind():
    try:
        return jax.devices()[0].device_kind.lower()
    except Exception:
        return ""


def _vmem_capacity_bytes():
    try:
        return int(pltpu.get_tpu_info().vmem_capacity_bytes)
    except Exception:
        pass
    kind = _device_kind()
    if "v7" in kind:
        return 64 << 20
    if "v4" in kind or "v5" in kind or "v6" in kind:
        return 128 << 20
    return 64 << 20        # unknown generation: be conservative


def _default_q_tile():
    # 256-wide MXU + 128 MiB VMEM on v6e benefits from bigger tiles; keep 128
    # on v5e (128-wide MXU) and v7x (64 MiB VMEM budget).
    return 256 if "v6" in _device_kind() else 128


def encoder_block_pallas(x, params, heads, *, q_tile=None):
    B, S, D = x.shape
    M = params["w1"].shape[1]
    assert D % heads == 0, "embedding_dim must be divisible by heads"
    hd = D // heads
    scale = 1.0 / math.sqrt(hd)
    f32, bf16 = jnp.float32, jnp.bfloat16

    if q_tile is None:
        q_tile = _default_q_tile()
    # Sequence lengths that don't divide the tile (e.g. ViT's 197) fall back
    # to a single full-sequence tile instead of being rejected.
    TQ = q_tile if (S % q_tile == 0) else S
    QT = S // TQ

    # ---- weight prep: fuse QKV, fold LN1/LN2 affine + attention scale -------
    wqkv0 = jnp.concatenate([params["wq"], params["wk"], params["wv"]], axis=1)
    bqkv0 = jnp.concatenate([params["bq"], params["bk"], params["bv"]], axis=1)
    g1 = params["ln1_g"].reshape(D, 1).astype(f32)
    beta1 = params["ln1_b"].reshape(1, D).astype(f32)
    scale_row = jnp.concatenate(
        [jnp.full((1, D), scale, f32), jnp.ones((1, 2 * D), f32)], axis=1)
    wqkv = ((g1 * wqkv0) * scale_row).astype(bf16)           # (D, 3D) bf16
    bqkv = ((beta1 @ wqkv0 + bqkv0) * scale_row).astype(f32)  # (1, 3D) f32

    g2 = params["ln2_g"].reshape(D, 1).astype(f32)
    beta2 = params["ln2_b"].reshape(1, D).astype(f32)
    w1 = (g2 * params["w1"]).astype(bf16)                    # (D, M) bf16
    b1 = (beta2 @ params["w1"] + params["b1"]).astype(f32)   # (1, M) f32

    wo = params["wo"].astype(bf16)
    bo = params["bo"].astype(f32)
    w2 = params["w2"].astype(bf16)
    b2 = params["b2"].astype(f32)

    # Grid-invariant operands: whole array resident in VMEM, copied once and
    # single-buffered (no double-buffer residency for constants).
    vmem_full = pl.BlockSpec(memory_space=pltpu.MemorySpace.VMEM)

    vmem_cap = _vmem_capacity_bytes()

    def clamp_limit(est_bytes):
        return int(min(max(int(est_bytes), 16 << 20), int(vmem_cap * 0.75)))

    # ------------------------- stage 1: LN1 + QKV ----------------------------
    est1 = (wqkv.size * 2 + bqkv.size * 4          # single-buffered weights
            + 2 * TQ * D * 4                       # x block (double-buffered)
            + 2 * 3 * TQ * D * 2                   # q / k / v out blocks
            + 3 * TQ * 3 * D * 4)                  # live f32 qkv temporaries
    q_s, k_s, v_s = pl.pallas_call(
        _qkv_kernel,
        out_shape=(jax.ShapeDtypeStruct((B, S, D), bf16),
                   jax.ShapeDtypeStruct((B, S, D), bf16),
                   jax.ShapeDtypeStruct((B, S, D), bf16)),
        grid=(B, QT),
        in_specs=[
            pl.BlockSpec((pl.Squeezed(), TQ, D), lambda b, qi: (b, qi, 0)),
            vmem_full,                             # wqkv (LN1 + scale folded)
            vmem_full,                             # bqkv
        ],
        out_specs=(
            pl.BlockSpec((pl.Squeezed(), TQ, D), lambda b, qi: (b, qi, 0)),
            pl.BlockSpec((pl.Squeezed(), TQ, D), lambda b, qi: (b, qi, 0)),
            pl.BlockSpec((pl.Squeezed(), TQ, D), lambda b, qi: (b, qi, 0)),
        ),
        compiler_params=pltpu.CompilerParams(
            dimension_semantics=("parallel", "parallel"),
            vmem_limit_bytes=clamp_limit(2 * est1)),
        cost_estimate=pl.CostEstimate(
            flops=2 * B * S * D * 3 * D,
            transcendentals=B * S,
            bytes_accessed=(B * S * D * 4 + wqkv.size * 2 + bqkv.size * 4
                            + 3 * B * S * D * 2)),
    )(x, wqkv, bqkv)

    # K pre-transposed once per row (cheap XLA transpose in bf16) so the
    # in-kernel score matmul needs no per-head / per-tile RHS relayout.
    kT_s = jnp.swapaxes(k_s, 1, 2)                 # (B, D, S) bf16

    # --------- stage 2: attention + out-proj + LN2 + MLP + residuals ---------
    est2 = ((wo.size + w1.size + w2.size) * 2
            + (bo.size + b1.size + b2.size) * 4    # single-buffered weights
            + 2 * 2 * S * D * 2                    # k^T / v blocks (dbl-buffered)
            + 2 * TQ * D * (4 + 2 + 4)             # x / q / out blocks
            + TQ * D * 2                           # per-head output scratch
            + 3 * TQ * S * 4 + 3 * TQ * M * 4)     # live score / MLP tiles
    out = pl.pallas_call(
        make_attn_mlp_kernel(heads),
        out_shape=jax.ShapeDtypeStruct((B, S, D), x.dtype),
        grid=(B, QT),
        in_specs=[
            pl.BlockSpec((pl.Squeezed(), TQ, D), lambda b, qi: (b, qi, 0)),  # x
            pl.BlockSpec((pl.Squeezed(), TQ, D), lambda b, qi: (b, qi, 0)),  # q
            pl.BlockSpec((pl.Squeezed(), D, S), lambda b, qi: (b, 0, 0)),    # k^T
            pl.BlockSpec((pl.Squeezed(), S, D), lambda b, qi: (b, 0, 0)),    # v
            vmem_full, vmem_full,                  # wo, bo
            vmem_full, vmem_full,                  # w1 (LN2 folded), b1
            vmem_full, vmem_full,                  # w2, b2
        ],
        out_specs=pl.BlockSpec((pl.Squeezed(), TQ, D), lambda b, qi: (b, qi, 0)),
        scratch_shapes=[pltpu.VMEM((TQ, D), jnp.bfloat16)],   # per-head outputs
        compiler_params=pltpu.CompilerParams(
            dimension_semantics=("parallel", "parallel"),
            vmem_limit_bytes=clamp_limit(2 * est2)),
        cost_estimate=pl.CostEstimate(
            flops=2 * B * S * (D * D + 2 * D * M + 2 * S * D),
            transcendentals=B * S * (heads * S + M),
            bytes_accessed=(2 * B * S * D * 4 + 3 * B * S * D * 2
                            + (wo.size + w1.size + w2.size) * 2
                            + (bo.size + b1.size + b2.size) * 4)),
    )(x, q_s, kT_s, v_s, wo, bo, w1, b1, w2, b2)
    return out


# ------------------------------- reference -----------------------------------


def _layernorm_ref(v, g, b):
    mu = jnp.mean(v, axis=-1, keepdims=True)
    var = jnp.mean((v - mu) ** 2, axis=-1, keepdims=True)
    return (v - mu) * lax.rsqrt(var + EPS) * g + b


def encoder_block_ref(x, p, heads):
    """Pure-JAX f32 reference (same math, vectorized over batch)."""
    B, S, D = x.shape
    hd = D // heads
    scale = 1.0 / math.sqrt(hd)

    h = _layernorm_ref(x, p["ln1_g"], p["ln1_b"])
    q = h @ p["wq"] + p["bq"]
    k = h @ p["wk"] + p["bk"]
    v = h @ p["wv"] + p["bv"]
    q = q.reshape(B, S, heads, hd).transpose(0, 2, 1, 3)
    k = k.reshape(B, S, heads, hd).transpose(0, 2, 1, 3)
    v = v.reshape(B, S, heads, hd).transpose(0, 2, 1, 3)
    scores = jnp.einsum("bhqd,bhkd->bhqk", q, k) * scale
    probs = jax.nn.softmax(scores, axis=-1)
    attn = jnp.einsum("bhqk,bhkd->bhqd", probs, v)
    attn = attn.transpose(0, 2, 1, 3).reshape(B, S, D)
    attn = attn @ p["wo"] + p["bo"]
    x2 = x + attn

    h2 = _layernorm_ref(x2, p["ln2_g"], p["ln2_b"])
    m = h2 @ p["w1"] + p["b1"]
    m = jax.nn.gelu(m, approximate=True)
    m = m @ p["w2"] + p["b2"]
    return x2 + m


def init_params(key, D, M):
    keys = jax.random.split(key, 8)
    s = 0.05
    return {
        "ln1_g": jnp.ones((1, D), jnp.float32),
        "ln1_b": jnp.zeros((1, D), jnp.float32),
        "wq": s * jax.random.normal(keys[0], (D, D), jnp.float32),
        "bq": jnp.zeros((1, D), jnp.float32),
        "wk": s * jax.random.normal(keys[1], (D, D), jnp.float32),
        "bk": jnp.zeros((1, D), jnp.float32),
        "wv": s * jax.random.normal(keys[2], (D, D), jnp.float32),
        "bv": jnp.zeros((1, D), jnp.float32),
        "wo": s * jax.random.normal(keys[3], (D, D), jnp.float32),
        "bo": jnp.zeros((1, D), jnp.float32),
        "ln2_g": jnp.ones((1, D), jnp.float32),
        "ln2_b": jnp.zeros((1, D), jnp.float32),
        "w1": s * jax.random.normal(keys[4], (D, M), jnp.float32),
        "b1": jnp.zeros((1, M), jnp.float32),
        "w2": s * jax.random.normal(keys[5], (M, D), jnp.float32),
        "b2": jnp.zeros((1, D), jnp.float32),
    }


if __name__ == "__main__":
    # Small ViT-style shapes: batch=2, seq=8, embedding_dim=32, mlp_dim=64, heads=4
    B, S, D, M, H = 2, 8, 32, 64, 4
    key = jax.random.PRNGKey(0)
    kx, kp = jax.random.split(key)
    x = jax.random.normal(kx, (B, S, D), jnp.float32)
    params = init_params(kp, D, M)

    out = jax.block_until_ready(encoder_block_pallas(x, params, H))
    ref = encoder_block_ref(x, params, H)

    assert out.shape == (B, S, D)
    err = float(jnp.max(jnp.abs(out - ref)))
    # bf16 matmuls + approx reciprocal vs f32 reference -> loosened tolerance
    assert err < 3e-2, f"mismatch vs reference: {err}"
    print("KERNEL_OK")
</pallas_src>

<mosaic_0001>
module attributes {stable_mosaic.version = 11 : i64} {
  func.func @_qkv_kernel(%arg0: i32, %arg1: i32, %arg2: memref<1x8x32xf32, #tpu.memory_space<vmem>>, %arg3: memref<32x96xbf16, #tpu.memory_space<vmem>>, %arg4: memref<1x96xf32, #tpu.memory_space<vmem>>, %arg5: memref<1x8x32xbf16, #tpu.memory_space<vmem>>, %arg6: memref<1x8x32xbf16, #tpu.memory_space<vmem>>, %arg7: memref<1x8x32xbf16, #tpu.memory_space<vmem>>) attributes {dimension_semantics = [#tpu.dimension_semantics<parallel>, #tpu.dimension_semantics<parallel>], iteration_bounds = array<i64: 2, 1>, scalar_prefetch = 0 : i64, scratch_operands = 0 : i64, tpu.core_type = #tpu.core_type<tc>, window_params = [{transform_indices = @transform_0, window_bounds = array<i64: 1, 8, 32>}, {pipeline_mode = #tpu.pipeline_mode<synchronous>, transform_indices = @transform_1, window_bounds = array<i64: 32, 96>}, {pipeline_mode = #tpu.pipeline_mode<synchronous>, transform_indices = @transform_2, window_bounds = array<i64: 1, 96>}, {transform_indices = @transform_3, window_bounds = array<i64: 1, 8, 32>}, {transform_indices = @transform_4, window_bounds = array<i64: 1, 8, 32>}, {transform_indices = @transform_5, window_bounds = array<i64: 1, 8, 32>}]} {
    %c0 = arith.constant 0 : index
    %c0_0 = arith.constant 0 : index
    %c0_1 = arith.constant 0 : index
    %0 = vector.load %arg2[%c0, %c0_0, %c0_1] : memref<1x8x32xf32, #tpu.memory_space<vmem>>, vector<1x8x32xf32>
    %1 = vector.shape_cast %0 : vector<1x8x32xf32> to vector<8x32xf32>
    %cst = arith.constant dense<0.000000e+00> : vector<8xf32>
    %2 = vector.multi_reduction <add>, %1, %cst [1] : vector<8x32xf32> to vector<8xf32>
    %3 = vector.shape_cast %2 : vector<8xf32> to vector<8x1xf32>
    %cst_2 = arith.constant 3.200000e+01 : f32
    %4 = vector.broadcast %cst_2 : f32 to vector<8x1xf32>
    %5 = arith.divf %3, %4 : vector<8x1xf32>
    %6 = vector.broadcast %5 : vector<8x1xf32> to vector<8x32xf32>
    %7 = arith.subf %1, %6 : vector<8x32xf32>
    %8 = arith.mulf %7, %7 : vector<8x32xf32>
    %cst_3 = arith.constant dense<0.000000e+00> : vector<8xf32>
    %9 = vector.multi_reduction <add>, %8, %cst_3 [1] : vector<8x32xf32> to vector<8xf32>
    %10 = vector.shape_cast %9 : vector<8xf32> to vector<8x1xf32>
    %cst_4 = arith.constant 3.200000e+01 : f32
    %11 = vector.broadcast %cst_4 : f32 to vector<8x1xf32>
    %12 = arith.divf %10, %11 : vector<8x1xf32>
    %13 = vector.broadcast %5 : vector<8x1xf32> to vector<8x32xf32>
    %14 = arith.subf %1, %13 : vector<8x32xf32>
    %cst_5 = arith.constant 9.99999974E-6 : f32
    %15 = vector.broadcast %cst_5 : f32 to vector<8x1xf32>
    %16 = arith.addf %12, %15 : vector<8x1xf32>
    %17 = math.rsqrt %16 : vector<8x1xf32>
    %18 = vector.broadcast %17 : vector<8x1xf32> to vector<8x32xf32>
    %19 = arith.mulf %14, %18 : vector<8x32xf32>
    %20 = arith.truncf %19 : vector<8x32xf32> to vector<8x32xbf16>
    %c0_6 = arith.constant 0 : index
    %c0_7 = arith.constant 0 : index
    %21 = vector.load %arg3[%c0_6, %c0_7] : memref<32x96xbf16, #tpu.memory_space<vmem>>, vector<32x96xbf16>
    %cst_8 = arith.constant dense<0.000000e+00> : vector<8x96xf32>
    %22 = tpu.matmul %20, %21, %cst_8 {dimension_numbers = #tpu.dot_dimension_numbers<[1], [0], [0], [1], [0, 0, 1, 1], [], []>} : vector<8x32xbf16>, vector<32x96xbf16>, vector<8x96xf32> -> vector<8x96xf32>
    %c0_9 = arith.constant 0 : index
    %c0_10 = arith.constant 0 : index
    %23 = vector.load %arg4[%c0_9, %c0_10] : memref<1x96xf32, #tpu.memory_space<vmem>>, vector<1x96xf32>
    %24 = vector.broadcast %23 : vector<1x96xf32> to vector<8x96xf32>
    %25 = arith.addf %22, %24 : vector<8x96xf32>
    %26 = vector.extract_strided_slice %25 {offsets = [0, 0], sizes = [8, 32], strides = [1, 1]} : vector<8x96xf32> to vector<8x32xf32>
    %27 = arith.truncf %26 : vector<8x32xf32> to vector<8x32xbf16>
    %c0_11 = arith.constant 0 : index
    %c0_12 = arith.constant 0 : index
    %c0_13 = arith.constant 0 : index
    %28 = vector.load %arg5[%c0_11, %c0_12, %c0_13] : memref<1x8x32xbf16, #tpu.memory_space<vmem>>, vector<1x8x32xbf16>
    %29 = vector.shape_cast %28 : vector<1x8x32xbf16> to vector<8x32xbf16>
    %30 = vector.shape_cast %27 : vector<8x32xbf16> to vector<1x8x32xbf16>
    tpu.vector_store %arg5[%c0_11, %c0_12, %c0_13], %30 {strides = array<i32>} : memref<1x8x32xbf16, #tpu.memory_space<vmem>>, vector<1x8x32xbf16>,
    %31 = vector.extract_strided_slice %25 {offsets = [0, 32], sizes = [8, 32], strides = [1, 1]} : vector<8x96xf32> to vector<8x32xf32>
    %32 = arith.truncf %31 : vector<8x32xf32> to vector<8x32xbf16>
    %c0_14 = arith.constant 0 : index
    %c0_15 = arith.constant 0 : index
    %c0_16 = arith.constant 0 : index
    %33 = vector.load %arg6[%c0_14, %c0_15, %c0_16] : memref<1x8x32xbf16, #tpu.memory_space<vmem>>, vector<1x8x32xbf16>
    %34 = vector.shape_cast %33 : vector<1x8x32xbf16> to vector<8x32xbf16>
    %35 = vector.shape_cast %32 : vector<8x32xbf16> to vector<1x8x32xbf16>
    tpu.vector_store %arg6[%c0_14, %c0_15, %c0_16], %35 {strides = array<i32>} : memref<1x8x32xbf16, #tpu.memory_space<vmem>>, vector<1x8x32xbf16>,
    %36 = vector.extract_strided_slice %25 {offsets = [0, 64], sizes = [8, 32], strides = [1, 1]} : vector<8x96xf32> to vector<8x32xf32>
    %37 = arith.truncf %36 : vector<8x32xf32> to vector<8x32xbf16>
    %c0_17 = arith.constant 0 : index
    %c0_18 = arith.constant 0 : index
    %c0_19 = arith.constant 0 : index
    %38 = vector.load %arg7[%c0_17, %c0_18, %c0_19] : memref<1x8x32xbf16, #tpu.memory_space<vmem>>, vector<1x8x32xbf16>
    %39 = vector.shape_cast %38 : vector<1x8x32xbf16> to vector<8x32xbf16>
    %40 = vector.shape_cast %37 : vector<8x32xbf16> to vector<1x8x32xbf16>
    tpu.vector_store %arg7[%c0_17, %c0_18, %c0_19], %40 {strides = array<i32>} : memref<1x8x32xbf16, #tpu.memory_space<vmem>>, vector<1x8x32xbf16>,
    return
  }
  func.func @transform_0(%arg0: i32, %arg1: i32) -> (i32, i32, i32) {
    %c0_i32 = arith.constant 0 : i32
    %c0_i32_0 = arith.constant 0 : i32
    return %arg0, %arg1, %c0_i32 : i32, i32, i32
  }
  func.func @transform_1(%arg0: i32, %arg1: i32) -> (i32, i32) {
    %c0_i32 = arith.constant 0 : i32
    %c0_i32_0 = arith.constant 0 : i32
    %c0_i32_1 = arith.constant 0 : i32
    return %c0_i32, %c0_i32_0 : i32, i32
  }
  func.func @transform_2(%arg0: i32, %arg1: i32) -> (i32, i32) {
    %c0_i32 = arith.constant 0 : i32
    %c0_i32_0 = arith.constant 0 : i32
    %c0_i32_1 = arith.constant 0 : i32
    return %c0_i32, %c0_i32_0 : i32, i32
  }
  func.func @transform_3(%arg0: i32, %arg1: i32) -> (i32, i32, i32) {
    %c0_i32 = arith.constant 0 : i32
    %c0_i32_0 = arith.constant 0 : i32
    return %arg0, %arg1, %c0_i32 : i32, i32, i32
  }
  func.func @transform_4(%arg0: i32, %arg1: i32) -> (i32, i32, i32) {
    %c0_i32 = arith.constant 0 : i32
    %c0_i32_0 = arith.constant 0 : i32
    return %arg0, %arg1, %c0_i32 : i32, i32, i32
  }
  func.func @transform_5(%arg0: i32, %arg1: i32) -> (i32, i32, i32) {
    %c0_i32 = arith.constant 0 : i32
    %c0_i32_0 = arith.constant 0 : i32
    return %arg0, %arg1, %c0_i32 : i32, i32, i32
  }
}

</mosaic_0001>

<llo_original>
// kernel: tpu_custom_call.1
$region0: #{tpu_custom_call.1}
  #allocation0 [shape = 'u32[]', space=smem, size = 0x4, offset = 0x4, fixed_abs, tag = 'smem constant byte address 0x4 - core index']
  #allocation1 [shape = 'u32[144,128]{1,0:T(1,128)}', space=vmem, size = 0x12000, scoped, tag = 'internal scratch']
  %s0 = inlined_call_operand.hbm [shape: f32[2,8,32], index: 0, kind: input, shape index: {}]
  %s1 = inlined_call_operand.hbm [shape: bf16[32,96], index: 1, kind: input, shape index: {}]
  %s2 = inlined_call_operand.vmem [shape: f32[1,96], index: 2, kind: input, shape index: {}]
  %s3 = inlined_call_operand.hbm [shape: bf16[2,8,32], index: 3, kind: output, shape index: {0}]
  %s4 = inlined_call_operand.hbm [shape: bf16[2,8,32], index: 4, kind: output, shape index: {1}]
  %s5 = inlined_call_operand.hbm [shape: bf16[2,8,32], index: 5, kind: output, shape index: {2}]
  %6 = xla_tuple %s3, %s4, %s5
  %s7 = sld [smem:[#allocation0]]
  $region69: #{tpu_custom_call.1} parent=0
    _
  %s9 = ssub.s32 1, %s7
  %s10 = scalar_select 0, %s9, %s7
  $region1: #{tpu_custom_call.1} parent=0
    #allocation2 [shape = 'u8[8192]{0}', space=vmem, size = 0x2000, scoped, tag = 'input window, operand 0']
    #allocation3 [shape = 's32[2]{0}', space=sflag, size = 0x8, scoped, tag = 'scoped memory for tpu_custom_call.1']
    #allocation4 [shape = 's32[2]{0}', space=sflag, size = 0x8, scoped, tag = 'scoped memory for tpu_custom_call.1']
    #allocation5 [shape = 'u8[8192]{0}', space=vmem, size = 0x2000, scoped, tag = 'input window, operand 1, single buffered']
    #allocation6 [shape = 's32[1]{0}', space=sflag, size = 0x4, scoped, tag = 'scoped memory for tpu_custom_call.1']
    #allocation7 [shape = 'u8[4096]{0}', space=vmem, size = 0x1000, scoped, tag = 'output window, operand 0']
    #allocation8 [shape = 'u8[4096]{0}', space=vmem, size = 0x1000, scoped, tag = 'output window, operand 1']
    #allocation9 [shape = 's32[2]{0}', space=sflag, size = 0x8, scoped, tag = 'scoped memory for tpu_custom_call.1']
    #allocation10 [shape = 'u8[4096]{0}', space=vmem, size = 0x1000, scoped, tag = 'output window, operand 2']
    %11 = vsyncpa [#allocation3], 0
    %s12 = scalar_lea.sflag [#allocation3], 1
    %13 = vsyncpa %s12, 0
    %14 = vsyncpa [#allocation6], 0
    %15 = vsyncpa [#allocation4], 0
    %s16 = scalar_lea.sflag [#allocation4], 1
    %17 = vsyncpa %s16, 0
    %18 = vsyncpa [#allocation9], 0
    %s19 = scalar_lea.sflag [#allocation9], 1
    %20 = vsyncpa %s19, 0
    loop: start=0, step=1, limit=4
    $region2: #{tpu_custom_call.1} parent=1 // loop_pre_header
      _
    $region3: #{tpu_custom_call.1} parent=1 // loop_header
      %s22 = sphi 0, %s26
      %p23 = scmp.ge.s32.totalorder %s22, 4
      %s29 = sphi 0, %s41
      %s30 = sphi 0, %s37
      %s31 = sphi 0, %s29
      %s32 = sphi 0, %s30
      %s33 = sphi 0, %s31
      %s34 = sphi 0, %s32
      %s46 = sphi 0, %s48
      %s49 = sphi 0, %s46
      %s50 = sphi 0, %s49
      %s66 = sphi 0, %s50
      %s70 = sphi 0, %s70
      %s72 = sphi 0, %s70
      %s73 = sphi 0, %s72
      %s87 = sphi 0, %s73
      %s91 = sphi 0, %s91
      %s93 = sphi 0, %s91
      %s94 = sphi 0, %s93
      %s108 = sphi 0, %s94
      %s116 = sphi 0, %s118
      %s119 = sphi 0, %s116
      %s120 = sphi 0, %s119
      %s136 = sphi 0, %s120
      %s144 = sphi 0, %s146
      %s147 = sphi 0, %s144
      %s148 = sphi 0, %s147
      %s164 = sphi 0, %s148
      %s172 = sphi 0, %s174
      %s175 = sphi 0, %s172
      %s176 = sphi 0, %s175
      %s192 = sphi 0, %s176
    $region4: #{tpu_custom_call.1} parent=1 // loop_header_branch
      %25 = sbr.rel (%p23) target = $region8
    $region5: #{tpu_custom_call.1} parent=1 // loop_body
      %s27 = ssub.s32 %s22, 1
      %s28 = ssub.s32 %s22, 2
      %s35 = sadd.s32 1, %s30
      %p36 = scmp.ge.s32.totalorder %s35, 1
      %s37 = scalar_select %p36, 0, %s35
      %s38 = sadd.s32 1, %s29
      %s39 = scalar_select %p36, %s38, %s29
      %p40 = scmp.ge.s32.totalorder %s39, 2
      %s41 = scalar_select %p40, 0, %s39
      %s42 = ssub.s32 %s29, %s41
      %s43 = ssub.s32 %s30, %s37
      %s44 = sor.u32 %s42, %s43
      %p45 = scmp.eq.s32.totalorder %s44, 0
      %s47 = sadd.s32 %s46, 1
      %s48 = scalar_select %p45, %s46, %s47
      %p51 = pneg %p45
      %p52 = scmp.eq.s32.totalorder %s22, 1
      %p53 = por %p51, %p52
      %p54 = scmp.ne.s32.totalorder %s46, %s49
      %p55 = scmp.eq.s32.totalorder %s22, 0
      %p56 = por %p54, %p55
      %p57 = scmp.ne.s32.totalorder %s46, %s49
      %p58 = scmp.eq.s32.totalorder %s27, 1
      %p59 = por %p57, %p58
      %p60 = scmp.ne.s32.totalorder %s49, %s50
      %p61 = scmp.eq.s32.totalorder %s27, 0
      %p62 = por %p60, %p61
      %p63 = scmp.ne.s32.totalorder %s49, %s50
      %p64 = scmp.eq.s32.totalorder %s28, 1
      %p65 = por %p63, %p64
      %p67 = scmp.ne.s32.totalorder %s50, %s66
      %p68 = scmp.eq.s32.totalorder %s28, 0
      %p69 = por %p67, %p68
      %s71 = sadd.s32 %s70, 1
      %p74 = scmp.eq.s32.totalorder %s22, 1
      %p75 = scmp.ne.s32.totalorder %s70, %s72
      %p76 = scmp.eq.s32.totalorder %s22, 0
      %p77 = por %p75, %p76
      %p78 = scmp.ne.s32.totalorder %s70, %s72
      %p79 = scmp.eq.s32.totalorder %s27, 1
      %p80 = por %p78, %p79
      %p81 = scmp.ne.s32.totalorder %s72, %s73
      %p82 = scmp.eq.s32.totalorder %s27, 0
      %p83 = por %p81, %p82
      %p84 = scmp.ne.s32.totalorder %s72, %s73
      %p85 = scmp.eq.s32.totalorder %s28, 1
      %p86 = por %p84, %p85
      %p88 = scmp.ne.s32.totalorder %s73, %s87
      %p89 = scmp.eq.s32.totalorder %s28, 0
      %p90 = por %p88, %p89
      %s92 = sadd.s32 %s91, 1
      %p95 = scmp.eq.s32.totalorder %s22, 1
      %p96 = scmp.ne.s32.totalorder %s91, %s93
      %p97 = scmp.eq.s32.totalorder %s22, 0
      %p98 = por %p96, %p97
      %p99 = scmp.ne.s32.totalorder %s91, %s93
      %p100 = scmp.eq.s32.totalorder %s27, 1
      %p101 = por %p99, %p100
      %p102 = scmp.ne.s32.totalorder %s93, %s94
      %p103 = scmp.eq.s32.totalorder %s27, 0
      %p104 = por %p102, %p103
      %p105 = scmp.ne.s32.totalorder %s93, %s94
      %p106 = scmp.eq.s32.totalorder %s28, 1
      %p107 = por %p105, %p106
      %p109 = scmp.ne.s32.totalorder %s94, %s108
      %p110 = scmp.eq.s32.totalorder %s28, 0
      %p111 = por %p109, %p110
      %s112 = ssub.s32 %s29, %s41
      %s113 = ssub.s32 %s30, %s37
      %s114 = sor.u32 %s112, %s113
      %p115 = scmp.eq.s32.totalorder %s114, 0
      %s117 = sadd.s32 %s116, 1
      %s118 = scalar_select %p115, %s116, %s117
      %p121 = pneg %p115
      %p122 = scmp.eq.s32.totalorder %s22, 1
      %p123 = por %p121, %p122
      %p124 = scmp.ne.s32.totalorder %s116, %s119
      %p125 = scmp.eq.s32.totalorder %s22, 0
      %p126 = por %p124, %p125
      %p127 = scmp.ne.s32.totalorder %s116, %s119
      %p128 = scmp.eq.s32.totalorder %s27, 1
      %p129 = por %p127, %p128
      %p130 = scmp.ne.s32.totalorder %s119, %s120
      %p131 = scmp.eq.s32.totalorder %s27, 0
      %p132 = por %p130, %p131
      %p133 = scmp.ne.s32.totalorder %s119, %s120
      %p134 = scmp.eq.s32.totalorder %s28, 1
      %p135 = por %p133, %p134
      %p137 = scmp.ne.s32.totalorder %s120, %s136
      %p138 = scmp.eq.s32.totalorder %s28, 0
      %p139 = por %p137, %p138
      %s140 = ssub.s32 %s29, %s41
      %s141 = ssub.s32 %s30, %s37
      %s142 = sor.u32 %s140, %s141
      %p143 = scmp.eq.s32.totalorder %s142, 0
      %s145 = sadd.s32 %s144, 1
      %s146 = scalar_select %p143, %s144, %s145
      %p149 = pneg %p143
      %p150 = scmp.eq.s32.totalorder %s22, 1
      %p151 = por %p149, %p150
      %p152 = scmp.ne.s32.totalorder %s144, %s147
      %p153 = scmp.eq.s32.totalorder %s22, 0
      %p154 = por %p152, %p153
      %p155 = scmp.ne.s32.totalorder %s144, %s147
      %p156 = scmp.eq.s32.totalorder %s27, 1
      %p157 = por %p155, %p156
      %p158 = scmp.ne.s32.totalorder %s147, %s148
      %p159 = scmp.eq.s32.totalorder %s27, 0
      %p160 = por %p158, %p159
      %p161 = scmp.ne.s32.totalorder %s147, %s148
      %p162 = scmp.eq.s32.totalorder %s28, 1
      %p163 = por %p161, %p162
      %p165 = scmp.ne.s32.totalorder %s148, %s164
      %p166 = scmp.eq.s32.totalorder %s28, 0
      %p167 = por %p165, %p166
      %s168 = ssub.s32 %s29, %s41
      %s169 = ssub.s32 %s30, %s37
      %s170 = sor.u32 %s168, %s169
      %p171 = scmp.eq.s32.totalorder %s170, 0
      %s173 = sadd.s32 %s172, 1
      %s174 = scalar_select %p171, %s172, %s173
      %p177 = pneg %p171
      %p178 = scmp.eq.s32.totalorder %s22, 1
      %p179 = por %p177, %p178
      %p180 = scmp.ne.s32.totalorder %s172, %s175
      %p181 = scmp.eq.s32.totalorder %s22, 0
      %p182 = por %p180, %p181
      %p183 = scmp.ne.s32.totalorder %s172, %s175
      %p184 = scmp.eq.s32.totalorder %s27, 1
      %p185 = por %p183, %p184
      %p186 = scmp.ne.s32.totalorder %s175, %s176
      %p187 = scmp.eq.s32.totalorder %s27, 0
      %p188 = por %p186, %p187
      %p189 = scmp.ne.s32.totalorder %s175, %s176
      %p190 = scmp.eq.s32.totalorder %s28, 1
      %p191 = por %p189, %p190
      %p193 = scmp.ne.s32.totalorder %s176, %s192
      %p194 = scmp.eq.s32.totalorder %s28, 0
      %p195 = por %p193, %p194
      %p196 = scmp.le.s32.totalorder 1, %s22
      %p197 = scmp.lt.s32.totalorder %s22, 3
      %p198 = pnand %p196, %p197
      %p199 = pneg %p198
      // Predicated region
      $region9: #{tpu_custom_call.1} parent=5 // pred_check
        _
      $region10: #{tpu_custom_call.1} parent=5 // pred_check_branch
        %201 = sbr.rel (%p198) target = $region12
      $region11: #{tpu_custom_call.1} parent=5 // pred_region
        %s202 = ssub.s32 %s22, 1
        // Predicated region
        $region13: #{tpu_custom_call.1} parent=11 // pred_check
          %p203 = pneg %p83
        $region14: #{tpu_custom_call.1} parent=11 // pred_check_branch
          %205 = sbr.rel (%p203) target = $region16
        $region15: #{tpu_custom_call.1} parent=11 // pred_region
          %s207 = ssub.s32 256, 256
          %208 = vsyncadd [#allocation6], %s207
          %s209 = sshll.u32 [#allocation5], 4
          %s210 = int_to_ptr.vmem [resolvable:$true] %s209
          %215 = dma.hbm_to_vmem [thread:$0]  %s1, 256, %s210, [#allocation6], 64, 64, 4
        $region16: #{tpu_custom_call.1} parent=11 // pred_fallthru
          _
        // Predicated region
        $region17: #{tpu_custom_call.1} parent=11 // pred_check
          %p216 = pneg %p104
        $region18: #{tpu_custom_call.1} parent=11 // pred_check_branch
          %218 = sbr.rel (%p216) target = $region20
        $region19: #{tpu_custom_call.1} parent=11 // pred_region
          _
        $region20: #{tpu_custom_call.1} parent=11 // pred_fallthru
          _
      $region12: #{tpu_custom_call.1} parent=5 // pred_fallthru
        _
      %p219 = scmp.lt.s32.totalorder %s22, 2
      // Predicated region
      $region21: #{tpu_custom_call.1} parent=5 // pred_check
        %p220 = pneg %p219
      $region22: #{tpu_custom_call.1} parent=5 // pred_check_branch
        %222 = sbr.rel (%p220) target = $region24
      $region23: #{tpu_custom_call.1} parent=5 // pred_region
        // Predicated region
        $region25: #{tpu_custom_call.1} parent=23 // pred_check
          %p223 = pneg %p56
        $region26: #{tpu_custom_call.1} parent=23 // pred_check_branch
          %225 = sbr.rel (%p223) target = $region28
        $region27: #{tpu_custom_call.1} parent=23 // pred_region
          %s226 = sand.u32 %s46, 1
          %s227 = scalar_lea.sflag [#allocation3], %s226
          %s228 = sand.u32 %s46, 1
          %s229 = smul.addr %s228, 8
          %s230 = scalar_lea.vmem [#allocation2], %s229
          %s232 = ssub.s32 128, 128
          %233 = vsyncadd %s227, %s232
          %s234 = sadd.s32 %s30, %s29
          %s235 = smul.addr %s234, 128
          %s236 = scalar_lea.hbm %s0, %s235
          %s238 = sshll.u32 %s230, 4
          %s239 = int_to_ptr.vmem [resolvable:$true] %s238
          %241 = dma.hbm_to_vmem [thread:$0]  %s236, 128, %s239, %s227
        $region28: #{tpu_custom_call.1} parent=23 // pred_fallthru
          _
      $region24: #{tpu_custom_call.1} parent=5 // pred_fallthru
        _
      %p242 = scmp.le.s32.totalorder 1, %s22
      %p243 = scmp.lt.s32.totalorder %s22, 3
      %p244 = pnand %p242, %p243
      %p245 = pneg %p244
      // Predicated region
      $region29: #{tpu_custom_call.1} parent=5 // pred_check
        _
      $region30: #{tpu_custom_call.1} parent=5 // pred_check_branch
        %247 = sbr.rel (%p244) target = $region32
      $region31: #{tpu_custom_call.1} parent=5 // pred_region
        %s248 = ssub.s32 %s22, 1
        %s249 = sand.u32 %s49, 1
        %s250 = scalar_lea.sflag [#allocation3], %s249
        %s251 = sand.u32 %s49, 1
        %s252 = smul.addr %s251, 8
        %s253 = scalar_lea.vmem [#allocation2], %s252
        // Predicated region
        $region33: #{tpu_custom_call.1} parent=31 // pred_check
          %p254 = pneg %p62
        $region34: #{tpu_custom_call.1} parent=31 // pred_check_branch
          %256 = sbr.rel (%p254) target = $region36
        $region35: #{tpu_custom_call.1} parent=31 // pred_region
          %257 = dma.done %s250, 128
        $region36: #{tpu_custom_call.1} parent=31 // pred_fallthru
          _
        // Predicated region
        $region37: #{tpu_custom_call.1} parent=31 // pred_check
          %p258 = pneg %p83
        $region38: #{tpu_custom_call.1} parent=31 // pred_check_branch
          %260 = sbr.rel (%p258) target = $region40
        $region39: #{tpu_custom_call.1} parent=31 // pred_region
          %261 = dma.done [#allocation6], 256
        $region40: #{tpu_custom_call.1} parent=31 // pred_fallthru
          _
        %s262 = sand.u32 %s49, 1
        %s263 = scalar_lea.sflag [#allocation3], %s262
        %s264 = sand.u32 %s49, 1
        %s265 = smul.addr %s264, 8
        %s266 = scalar_lea.vmem [#allocation2], %s265
        %p267 = pneg %p62
        %p268 = pneg %p59
        %p269 = pneg %p83
        %p270 = pneg %p80
        %p271 = pneg %p104
        %p272 = pneg %p101
        %p273 = pneg %p132
        %p274 = pneg %p129
        %s275 = sand.u32 %s119, 1
        %s276 = scalar_lea.sflag [#allocation4], %s275
        %s277 = sand.u32 %s119, 1
        %s278 = smul.addr %s277, 4
        %s279 = scalar_lea.vmem [#allocation7], %s278
        %p280 = pneg %p160
        %p281 = pneg %p157
        %s282 = sand.u32 %s27, 1
        %s283 = scalar_lea.sflag [#allocation9], %s282
        %s284 = sand.u32 %s147, 1
        %s285 = smul.addr %s284, 4
        %s286 = scalar_lea.vmem [#allocation8], %s285
        %p287 = pneg %p188
        %p288 = pneg %p185
        %s289 = sand.u32 %s27, 1
        %s290 = scalar_lea.sflag [#allocation9], %s289
        %s291 = sand.u32 %s175, 1
        %s292 = smul.addr %s291, 4
        %s293 = scalar_lea.vmem [#allocation10], %s292
        %v295 = vld [vmem:[%s253] sm:$0xff]
        %vm296 = vcmask 261120
        %v297 = vsel %vm296, %v295, 0.0
        %298 = vadd.xlane.f32.xlu0 %v297
        %v299 = vpop.xlane.xlu0 %298
        %v300 = vrcp.pop 32.0
        %v301 = vmul.f32 %v299, %v300
        %v302 = vsub.f32 %v295, %v301
        %v303 = vmul.f32 %v302, %v302
        %v304 = vsel %vm296, %v303, 0.0
        %305 = vadd.xlane.f32.xlu0 %v304
        %v306 = vpop.xlane.xlu0 %305
        %v307 = vmul.f32 %v306, %v300
        %v308 = vadd.f32 %v307, 1e-05
        %v309 = vrsqrt.pop %v308
        %v310 = vmul.f32 %v302, %v309
        %v311 = vpack.c.bf16 %v310, %v310
        %v312 = vld [vmem:[#allocation5] sm:$0xf]
        %v313 = vld [vmem:[#allocation5 + $0x4] sm:$0xf]
        %v314 = vld [vmem:[#allocation5 + $0x8] sm:$0xf]
        %v315 = vld [vmem:[#allocation5 + $0xc] sm:$0xf]
        %v316 = vld [vmem:[%s2] sm:$0x1]
        %v318 = vlaneseq
        %v319 = vshrl.u32 %v318, 7
        %v320 = vsub.s32 0, %v319
        %v321 = vrot.slane %v316, %v320
        %v327 = vunpack.c.l.b16 %v312
        %v328 = vunpack.c.l.b16 %v313
        %v329 = vunpack.c.l.b16 %v314
        %v330 = vunpack.c.l.b16 %v315
        %v331 = vpack.c.b16 %v328, %v327
        %v332 = vpack.c.b16 %v330, %v329
        %v336 = vsel %vm296, %v311, 0
        %338 = vmatprep.subr.bf16.mxu0 0
        %339 = vmatpush1.bf16.msra.mxu0 0
        %340 = vmatprep.subr.bf16.mxu0 0
        %341 = vmatpush1.bf16.msra.mxu0 0
        %342 = vmatprep.subr.bf16.mxu0 0
        %343 = vmatpush1.bf16.msra.mxu0 0
        %344 = vmatprep.subr.bf16.mxu0 0
        %345 = vmatpush1.bf16.msra.mxu0 0
        %346 = vmatprep.subr.bf16.mxu0 0
        %347 = vmatpush1.bf16.msra.mxu0 0
        %348 = vmatprep.subr.bf16.mxu0 0
        %349 = vmatpush1.bf16.msra.mxu0 0
        %350 = vmatprep.subr.bf16.mxu0 0
        %351 = vmatpush1.bf16.msra.mxu0 %v332
        %352 = vmatprep.subr.bf16.mxu0 0
        %353 = vmatpush1.bf16.msra.mxu0 %v331
        %354 = vmatprep.subr.bf16.mxu0 0
        %355 = vmatpush2.bf16.msra.mxu0 0
        %356 = vmatprep.subr.bf16.mxu0 0
        %357 = vmatpush2.bf16.msra.mxu0 0
        %358 = vmatprep.subr.bf16.mxu0 0
        %359 = vmatpush2.bf16.msra.mxu0 0
        %360 = vmatprep.subr.bf16.mxu0 0
        %361 = vmatpush2.bf16.msra.mxu0 0
        %362 = vmatprep.subr.bf16.mxu0 0
        %363 = vmatpush2.bf16.msra.mxu0 0
        %364 = vmatprep.subr.bf16.mxu0 0
        %365 = vmatpush2.bf16.msra.mxu0 0
        %366 = vmatprep.subr.bf16.mxu0 0
        %367 = vmatpush2.bf16.msra.mxu0 0
        %368 = vmatprep.subr.bf16.mxu0 0
        %369 = vmatpush2.bf16.msra.mxu0 0
        %370 = vmatprep.mubr.bf16.mxu0 0
        %371 = vmatmul.mubr.bf16.gmra.mxu0 %v336
        %v372 = vpop.f32.mrf.mxu0
        %v373 = vadd.f32 %v321, %v372
        %v374 = vpop.f32.mrf.mxu0
        %v375 = vpop.f32.mrf.mxu0
        %v376 = vpop.f32.mrf.mxu0
        %377 = vdwg.mxu0
        %v378 = vpack.c.bf16 %v373, %v373
        %vm379 = vcmask 257024
        %380 = vst.msk [vmem:[%s279] sm:$0xf] %vm379, %v378
        %v382 = vunpack.c.l.b16 %v378
        %v383 = vpack.c.b16 %v382, %v382
        %384 = vrot.lane.b32.xlu0 %v383, 96
        %v385 = vpop.permute.xlu0 %384
        %387 = vst.msk [vmem:[%s286] sm:$0xf] %vm379, %v385
        %388 = vrot.lane.b32.xlu0 %v383, 64
        %v389 = vpop.permute.xlu0 %388
        %391 = vst.msk [vmem:[%s293] sm:$0xf] %vm379, %v389
        %s392 = sand.u32 %s119, 1
        %s393 = scalar_lea.sflag [#allocation4], %s392
        %s394 = sand.u32 %s119, 1
        %s395 = smul.addr %s394, 4
        %s396 = scalar_lea.vmem [#allocation7], %s395
        %s397 = sand.u32 %s27, 1
        %s398 = scalar_lea.sflag [#allocation9], %s397
        %s399 = sand.u32 %s147, 1
        %s400 = smul.addr %s399, 4
        %s401 = scalar_lea.vmem [#allocation8], %s400
        %s402 = sand.u32 %s27, 1
        %s403 = scalar_lea.sflag [#allocation9], %s402
        %s404 = sand.u32 %s175, 1
        %s405 = smul.addr %s404, 4
        %s406 = scalar_lea.vmem [#allocation10], %s405
        // Predicated region
        $region41: #{tpu_custom_call.1} parent=31 // pred_check
          %p407 = pneg %p129
        $region42: #{tpu_custom_call.1} parent=31 // pred_check_branch
          %409 = sbr.rel (%p407) target = $region44
        $region43: #{tpu_custom_call.1} parent=31 // pred_region
          %s411 = ssub.s32 64, 64
          %412 = vsyncadd %s393, %s411
          %s413 = sadd.s32 %s32, %s31
          %s414 = smul.addr %s413, 64
          %s415 = scalar_lea.hbm %s3, %s414
          %s417 = sshll.u32 %s396, 4
          %s418 = int_to_ptr.vmem [resolvable:$true] %s417
          %420 = dma.vmem_to_hbm [thread:$0]  %s418, 64, %s415, %s393
        $region44: #{tpu_custom_call.1} parent=31 // pred_fallthru
          _
        // Predicated region
        $region45: #{tpu_custom_call.1} parent=31 // pred_check
          %p421 = pneg %p157
        $region46: #{tpu_custom_call.1} parent=31 // pred_check_branch
          %423 = sbr.rel (%p421) target = $region48
        $region47: #{tpu_custom_call.1} parent=31 // pred_region
          %s425 = ssub.s32 64, 64
          %426 = vsyncadd %s398, %s425
          %s427 = sadd.s32 %s32, %s31
          %s428 = smul.addr %s427, 64
          %s429 = scalar_lea.hbm %s4, %s428
          %s431 = sshll.u32 %s401, 4
          %s432 = int_to_ptr.vmem [resolvable:$true] %s431
          %434 = dma.vmem_to_hbm [thread:$0]  %s432, 64, %s429, %s398
        $region48: #{tpu_custom_call.1} parent=31 // pred_fallthru
          _
        // Predicated region
        $region49: #{tpu_custom_call.1} parent=31 // pred_check
          %p435 = pneg %p185
        $region50: #{tpu_custom_call.1} parent=31 // pred_check_branch
          %437 = sbr.rel (%p435) target = $region52
        $region51: #{tpu_custom_call.1} parent=31 // pred_region
          %s439 = ssub.s32 64, 64
          %440 = vsyncadd %s403, %s439
          %s441 = sadd.s32 %s32, %s31
          %s442 = smul.addr %s441, 64
          %s443 = scalar_lea.hbm %s5, %s442
          %s445 = sshll.u32 %s406, 4
          %s446 = int_to_ptr.vmem [resolvable:$true] %s445
          %448 = dma.vmem_to_hbm [thread:$0]  %s446, 64, %s443, %s403
        $region52: #{tpu_custom_call.1} parent=31 // pred_fallthru
          _
      $region32: #{tpu_custom_call.1} parent=5 // pred_fallthru
        _
      %p449 = scmp.le.s32.totalorder 2, %s22
      // Predicated region
      $region53: #{tpu_custom_call.1} parent=5 // pred_check
        %p450 = pneg %p449
      $region54: #{tpu_custom_call.1} parent=5 // pred_check_branch
        %452 = sbr.rel (%p450) target = $region56
      $region55: #{tpu_custom_call.1} parent=5 // pred_region
        %s453 = ssub.s32 %s22, 2
        // Predicated region
        $region57: #{tpu_custom_call.1} parent=55 // pred_check
          %p454 = pneg %p135
        $region58: #{tpu_custom_call.1} parent=55 // pred_check_branch
          %456 = sbr.rel (%p454) target = $region60
        $region59: #{tpu_custom_call.1} parent=55 // pred_region
          %s457 = sand.u32 %s120, 1
          %s458 = scalar_lea.sflag [#allocation4], %s457
          %s459 = sand.u32 %s120, 1
          %s460 = smul.addr %s459, 4
          %s461 = scalar_lea.vmem [#allocation7], %s460
          %462 = dma.done %s458, 64
        $region60: #{tpu_custom_call.1} parent=55 // pred_fallthru
          _
        // Predicated region
        $region61: #{tpu_custom_call.1} parent=55 // pred_check
          %p463 = pneg %p163
        $region62: #{tpu_custom_call.1} parent=55 // pred_check_branch
          %465 = sbr.rel (%p463) target = $region64
        $region63: #{tpu_custom_call.1} parent=55 // pred_region
          %s466 = sand.u32 %s28, 1
          %s467 = scalar_lea.sflag [#allocation9], %s466
          %s468 = sand.u32 %s148, 1
          %s469 = smul.addr %s468, 4
          %s470 = scalar_lea.vmem [#allocation8], %s469
          %471 = dma.done %s467, 64
        $region64: #{tpu_custom_call.1} parent=55 // pred_fallthru
          _
        // Predicated region
        $region65: #{tpu_custom_call.1} parent=55 // pred_check
          %p472 = pneg %p191
        $region66: #{tpu_custom_call.1} parent=55 // pred_check_branch
          %474 = sbr.rel (%p472) target = $region68
        $region67: #{tpu_custom_call.1} parent=55 // pred_region
          %s475 = sand.u32 %s28, 1
          %s476 = scalar_lea.sflag [#allocation9], %s475
          %s477 = sand.u32 %s176, 1
          %s478 = smul.addr %s477, 4
          %s479 = scalar_lea.vmem [#allocation10], %s478
          %480 = dma.done %s476, 64
        $region68: #{tpu_custom_call.1} parent=55 // pred_fallthru
          _
      $region56: #{tpu_custom_call.1} parent=5 // pred_fallthru
        _
    $region6: #{tpu_custom_call.1} parent=1 // loop_footer
      %s26 = sadd.s32 1, %s22
    $region7: #{tpu_custom_call.1} parent=1 // loop_footer_branch
      %21 = sbr.rel target = $region3
    $region8: #{tpu_custom_call.1} parent=1 // loop_exit
      _
    %481 = vsyncpa [#allocation3], 1
    %s482 = scalar_lea.sflag [#allocation3], 1
    %483 = vsyncpa %s482, 1
    %484 = vsyncpa [#allocation6], 1
    %485 = vsyncpa [#allocation4], 1
    %s486 = scalar_lea.sflag [#allocation4], 1
    %487 = vsyncpa %s486, 1
    %488 = vsyncpa [#allocation9], 1
    %s489 = scalar_lea.sflag [#allocation9], 1
    %490 = vsyncpa %s489, 1

</llo_original>
